<compile_context>
chip_gen: v6e
topology: v6e:2x2x1
jax: 0.10.0
libtpu: 0.0.40
codegen_flags: <defaults>
</compile_context>

<pallas_src>
import functools

import jax
import jax.numpy as jnp
from jax.experimental import pallas as pl
from jax.experimental.pallas import tpu as pltpu

_LANE = 128
_SUBLANE = 8


# ----------------------------------------------------------------------------
# Helpers (all shape math happens at trace time with static ints)
# ----------------------------------------------------------------------------
def _round_up(x, m):
    return ((x + m - 1) // m) * m


def _cdiv(a, b):
    return -(-a // b)


def _pick_divisor_tile(dim, unit, cap):
    """Largest multiple of `unit` dividing `dim` (dim % unit == 0) and <= cap."""
    best = unit
    t = unit
    stop = min(dim, cap)
    while t <= stop:
        if dim % t == 0:
            best = t
        t += unit
    return best


def _row_tile(M, cap_rows):
    """Row-tile size: full M (single block) or a multiple of 8, <= cap."""
    cap = max(_SUBLANE, (min(512, cap_rows) // _SUBLANE) * _SUBLANE)
    tm = M if M <= cap else cap
    # Megacore (v7x has 2 TCs): give the parallel row axis >= 2 blocks for
    # big inputs so half the chip doesn't idle.
    if M >= 256 and _cdiv(M, tm) == 1:
        tm = _round_up(_cdiv(M, 2), _SUBLANE)
    return tm


def _vmem_limit(est_bytes):
    # 32 MiB floor covers v5e's 16 MiB default scoped limit; 48 MiB cap stays
    # well inside v7x's 64 MiB/TC physical VMEM.
    return int(min(48 << 20, max(32 << 20, est_bytes + (8 << 20))))


# ----------------------------------------------------------------------------
# Kernel bodies
# ----------------------------------------------------------------------------
def _linear_block_kernel(x_ref, w_ref, b_ref, o_ref):
    """o = x @ W + b for one row-tile; W and bias are fully resident."""
    acc = jnp.dot(x_ref[...], w_ref[...], preferred_element_type=jnp.float32)
    o_ref[...] = (acc + b_ref[...].astype(jnp.float32)).astype(o_ref.dtype)


def _matmul_acc_kernel(x_ref, w_ref, b_ref, o_ref, acc_ref):
    """General tiled matmul with f32 VMEM accumulator over the k grid axis."""
    k = pl.program_id(2)

    @pl.when(k == 0)
    def _init():
        acc_ref[...] = jnp.zeros_like(acc_ref)

    acc_ref[...] += jnp.dot(
        x_ref[...], w_ref[...], preferred_element_type=jnp.float32
    )

    @pl.when(k == pl.num_programs(2) - 1)
    def _finalize():
        # Bias added once per output tile, in the finalize branch only.
        o_ref[...] = (acc_ref[...] + b_ref[...].astype(jnp.float32)).astype(o_ref.dtype)


# ----------------------------------------------------------------------------
# pallas_call wrappers
# ----------------------------------------------------------------------------
def _weight_resident_call(x2d, W, b2d, out_dtype):
    """Single-pass linear: W/bias resident in VMEM, x streamed in row tiles.

    Uses full-dim blocks for K and N (no padding, legal for any size since
    block == full array dim) and a cdiv grid on the row axis (no padding,
    boundary block masked).  Zero pad/slice HBM passes.
    """
    M, K = x2d.shape
    N = W.shape[1]
    itemsize = jnp.dtype(x2d.dtype).itemsize
    w_bytes = K * N * itemsize

    tiny = (M * K + K * N + M * N) * itemsize <= (1 << 20)
    if tiny:
        tm = M  # single full-array block; no (8,128) constraint applies
    else:
        # Per-row VMEM cost: double-buffered x + out rows, plus the f32 temp.
        per_row = 2 * (K + N) * itemsize + N * 4
        cap_rows = max(_SUBLANE, ((24 << 20) - 2 * w_bytes) // per_row)
        tm = _row_tile(M, cap_rows)

    est = 2 * (tm * K + K * N + tm * N + N) * itemsize + tm * N * 4

    return pl.pallas_call(
        _linear_block_kernel,
        out_shape=jax.ShapeDtypeStruct((M, N), out_dtype),
        grid_spec=pltpu.PrefetchScalarGridSpec(
            num_scalar_prefetch=0,
            grid=(_cdiv(M, tm),),
            in_specs=[
                pl.BlockSpec((tm, K), lambda i: (i, 0)),   # x row-tile (streamed)
                pl.BlockSpec((K, N), lambda i: (0, 0)),    # W fully resident
                pl.BlockSpec((1, N), lambda i: (0, 0)),    # bias resident
            ],
            out_specs=pl.BlockSpec((tm, N), lambda i: (i, 0)),
        ),
        compiler_params=pltpu.CompilerParams(
            dimension_semantics=("parallel",),
            vmem_limit_bytes=_vmem_limit(est),
        ),
    )(x2d, W, b2d)


def _tiled_matmul_call(x2d, W, b2d, out_dtype):
    """General 3-D-grid tiled matmul for weights too large to keep resident."""
    M, K = x2d.shape
    N = W.shape[1]
    itemsize = jnp.dtype(x2d.dtype).itemsize

    Kp = _round_up(K, _LANE)
    Np = _round_up(N, _LANE)

    # Divisor-aware tiles: no fractional-tile padding waste on K/N.
    tk = _pick_divisor_tile(Kp, _LANE, 1024)
    tn = _pick_divisor_tile(Np, _LANE, 512)
    tm = _row_tile(M, 512)

    # Pad only the dims that actually need it (pad/slice = full HBM passes).
    xp = x2d if Kp == K else jnp.pad(x2d, ((0, 0), (0, Kp - K)))
    Wp = W if (Kp == K and Np == N) else jnp.pad(W, ((0, Kp - K), (0, Np - N)))
    bp = b2d if Np == N else jnp.pad(b2d, ((0, 0), (0, Np - N)))

    est = 2 * (tm * tk + tk * tn + tm * tn + tn) * itemsize + tm * tn * 4

    out = pl.pallas_call(
        _matmul_acc_kernel,
        out_shape=jax.ShapeDtypeStruct((M, Np), out_dtype),
        grid_spec=pltpu.PrefetchScalarGridSpec(
            num_scalar_prefetch=0,
            grid=(_cdiv(M, tm), Np // tn, Kp // tk),   # reduction axis (k) last
            in_specs=[
                pl.BlockSpec((tm, tk), lambda i, j, k: (i, k)),   # x tile
                pl.BlockSpec((tk, tn), lambda i, j, k: (k, j)),   # W tile
                pl.BlockSpec((1, tn), lambda i, j, k: (0, j)),    # bias tile
            ],
            out_specs=pl.BlockSpec((tm, tn), lambda i, j, k: (i, j)),
            scratch_shapes=[pltpu.VMEM((tm, tn), jnp.float32)],
        ),
        compiler_params=pltpu.CompilerParams(
            dimension_semantics=("parallel", "parallel", "arbitrary"),
            vmem_limit_bytes=_vmem_limit(est),
        ),
    )(xp, Wp, bp)

    return out if Np == N else out[:, :N]


@functools.partial(jax.jit, static_argnames=("compute_dtype",))
def _linear_encoder(x2d, W, b, *, compute_dtype=None):
    out_dtype = x2d.dtype
    if compute_dtype is not None:
        cd = jnp.dtype(compute_dtype)
        x2d = x2d.astype(cd)
        W = W.astype(cd)

    K = x2d.shape[1]
    N = W.shape[1]
    itemsize = jnp.dtype(x2d.dtype).itemsize
    b2d = b.reshape(1, N)

    # Weight-resident single pass whenever W comfortably fits in VMEM
    # (double-buffered), else the general tiled fallback.
    if K * N * itemsize <= (4 << 20):
        return _weight_resident_call(x2d, W, b2d, out_dtype)
    return _tiled_matmul_call(x2d, W, b2d, out_dtype)


# ----------------------------------------------------------------------------
# Wrapper mirroring BaseModel
# ----------------------------------------------------------------------------
class BaseModelPallas:
    """JAX/Pallas realization of the (abstract) PyTorch BaseModel.

    config:  arbitrary dict (stored, mostly unused by compute — matches
             __init__).  Optional key "compute_dtype" (e.g. "bfloat16")
             selects the MXU input dtype; accumulation stays f32 and the
             output is cast back to the input dtype.
    encoder: None, or a tuple (W, b) of a linear encoder with W: (D, H),
             b: (H,).  When present, forward() applies it with a Pallas TPU
             matmul kernel.
    """

    def __init__(self, config, encoder=None):
        self.config = config
        self.encoder = encoder
        self.compute_dtype = None
        if isinstance(config, dict):
            self.compute_dtype = config.get("compute_dtype", None)

    def forward(self, inputs):
        """Returns dict of model outputs (matching the abstract contract)."""
        B, S, D = inputs.shape

        if self.encoder is None:
            # Identity forward.  A copy kernel would only burn HBM bandwidth.
            return {"outputs": inputs}

        W, b = self.encoder
        H = W.shape[1]
        x2d = inputs.reshape(B * S, D)
        out2d = _linear_encoder(x2d, W, b, compute_dtype=self.compute_dtype)
        return {"outputs": out2d.reshape(B, S, H)}

    # TODO(synk): compute_loss is @abstractmethod in the source (no body) —
    # nothing concrete to translate; subclasses must define it.
    def compute_loss(self, outputs, targets):
        raise NotImplementedError

    # TODO(synk): compute_metrics is @abstractmethod in the source (no body).
    def compute_metrics(self, outputs, targets):
        raise NotImplementedError


# ----------------------------------------------------------------------------
# Demo / smoke test
# ----------------------------------------------------------------------------
if __name__ == "__main__":
    key = jax.random.PRNGKey(0)
    kx, kw, kb, kx2, kw2, kb2, kx3, kw3, kb3 = jax.random.split(key, 9)

    # --- Path 1: encoder=None -> identity forward (no kernel). -------------
    B, S, D, H = 2, 8, 32, 32
    x = jax.random.normal(kx, (B, S, D), dtype=jnp.float32)

    model_plain = BaseModelPallas(config={"name": "base"}, encoder=None)
    out_plain = model_plain.forward(x)["outputs"]
    jax.block_until_ready(out_plain)
    assert out_plain.shape == (B, S, D)
    assert jnp.allclose(out_plain, x)

    # --- Path 2: tiny encoder (sub-128 dims, full-array blocks, no padding).
    W = jax.random.normal(kw, (D, H), dtype=jnp.float32) * 0.02
    b = jax.random.normal(kb, (H,), dtype=jnp.float32) * 0.01

    model_enc = BaseModelPallas(config={"name": "base"}, encoder=(W, b))
    out_enc = model_enc.forward(x)["outputs"]
    jax.block_until_ready(out_enc)
    assert out_enc.shape == (B, S, H)
    ref = x.reshape(B * S, D) @ W + b
    assert jnp.allclose(out_enc.reshape(B * S, H), ref, atol=1e-4, rtol=1e-4)

    # --- Path 3: weight-resident single-pass (K=1024, H=384; zero padding,
    #             2 row blocks for megacore). -------------------------------
    B2, S2, D2, H2 = 4, 64, 1024, 384
    x2 = jax.random.normal(kx2, (B2, S2, D2), dtype=jnp.float32)
    W2 = jax.random.normal(kw2, (D2, H2), dtype=jnp.float32) * 0.02
    b2 = jax.random.normal(kb2, (H2,), dtype=jnp.float32) * 0.01

    model_enc2 = BaseModelPallas(config={"name": "base"}, encoder=(W2, b2))
    out_enc2 = model_enc2.forward(x2)["outputs"]
    jax.block_until_ready(out_enc2)
    assert out_enc2.shape == (B2, S2, H2)
    ref2 = x2.reshape(B2 * S2, D2) @ W2 + b2
    assert jnp.allclose(out_enc2.reshape(B2 * S2, H2), ref2, atol=1e-2, rtol=1e-2)

    # --- Path 4: bf16 MXU path on the same shapes (f32 accumulation). ------
    model_bf16 = BaseModelPallas(
        config={"name": "base", "compute_dtype": "bfloat16"}, encoder=(W2, b2)
    )
    out_bf16 = model_bf16.forward(x2)["outputs"]
    jax.block_until_ready(out_bf16)
    assert out_bf16.shape == (B2, S2, H2)
    assert out_bf16.dtype == x2.dtype
    assert jnp.allclose(out_bf16.reshape(B2 * S2, D2 and H2), ref2, atol=5e-2, rtol=5e-2)

    # --- Path 5: large W -> general 3-D tiled kernel with f32 accumulator. -
    B3, S3, D3, H3 = 2, 128, 2048, 1536   # W = 12 MiB f32 -> tiled fallback
    x3 = jax.random.normal(kx3, (B3, S3, D3), dtype=jnp.float32)
    W3 = jax.random.normal(kw3, (D3, H3), dtype=jnp.float32) * 0.02
    b3 = jax.random.normal(kb3, (H3,), dtype=jnp.float32) * 0.01

    model_enc3 = BaseModelPallas(config={"name": "base"}, encoder=(W3, b3))
    out_enc3 = model_enc3.forward(x3)["outputs"]
    jax.block_until_ready(out_enc3)
    assert out_enc3.shape == (B3, S3, H3)
    ref3 = x3.reshape(B3 * S3, D3) @ W3 + b3
    assert jnp.allclose(out_enc3.reshape(B3 * S3, H3), ref3, atol=2e-2, rtol=2e-2)

    print("KERNEL_OK")
</pallas_src>

<mosaic_0001>
module attributes {stable_mosaic.version = 11 : i64} {
  func.func @_linear_block_kernel(%arg0: i32, %arg1: memref<16x32xf32, #tpu.memory_space<vmem>>, %arg2: memref<32x32xf32, #tpu.memory_space<vmem>>, %arg3: memref<1x32xf32, #tpu.memory_space<vmem>>, %arg4: memref<16x32xf32, #tpu.memory_space<vmem>>) attributes {dimension_semantics = [#tpu.dimension_semantics<parallel>], iteration_bounds = array<i64: 1>, scalar_prefetch = 0 : i64, scratch_operands = 0 : i64, tpu.core_type = #tpu.core_type<tc>, window_params = [{transform_indices = @transform_0, window_bounds = array<i64: 16, 32>}, {pipeline_mode = #tpu.pipeline_mode<synchronous>, transform_indices = @transform_1, window_bounds = array<i64: 32, 32>}, {pipeline_mode = #tpu.pipeline_mode<synchronous>, transform_indices = @transform_2, window_bounds = array<i64: 1, 32>}, {transform_indices = @transform_3, window_bounds = array<i64: 16, 32>}]} {
    %c0 = arith.constant 0 : index
    %c0_0 = arith.constant 0 : index
    %0 = vector.load %arg1[%c0, %c0_0] : memref<16x32xf32, #tpu.memory_space<vmem>>, vector<16x32xf32>
    %c0_1 = arith.constant 0 : index
    %c0_2 = arith.constant 0 : index
    %1 = vector.load %arg2[%c0_1, %c0_2] : memref<32x32xf32, #tpu.memory_space<vmem>>, vector<32x32xf32>
    %cst = arith.constant dense<0.000000e+00> : vector<16x32xf32>
    %2 = tpu.matmul %0, %1, %cst {dimension_numbers = #tpu.dot_dimension_numbers<[1], [0], [0], [1], [0, 0, 1, 1], [], []>} : vector<16x32xf32>, vector<32x32xf32>, vector<16x32xf32> -> vector<16x32xf32>
    %c0_3 = arith.constant 0 : index
    %c0_4 = arith.constant 0 : index
    %3 = vector.load %arg3[%c0_3, %c0_4] : memref<1x32xf32, #tpu.memory_space<vmem>>, vector<1x32xf32>
    %4 = vector.broadcast %3 : vector<1x32xf32> to vector<16x32xf32>
    %5 = arith.addf %2, %4 : vector<16x32xf32>
    %c0_5 = arith.constant 0 : index
    %c0_6 = arith.constant 0 : index
    %6 = vector.load %arg4[%c0_5, %c0_6] : memref<16x32xf32, #tpu.memory_space<vmem>>, vector<16x32xf32>
    tpu.vector_store %arg4[%c0_5, %c0_6], %5 {strides = array<i32>} : memref<16x32xf32, #tpu.memory_space<vmem>>, vector<16x32xf32>,
    return
  }
  func.func @transform_0(%arg0: i32) -> (i32, i32) {
    %c0_i32 = arith.constant 0 : i32
    %c0_i32_0 = arith.constant 0 : i32
    return %arg0, %c0_i32 : i32, i32
  }
  func.func @transform_1(%arg0: i32) -> (i32, i32) {
    %c0_i32 = arith.constant 0 : i32
    %c0_i32_0 = arith.constant 0 : i32
    %c0_i32_1 = arith.constant 0 : i32
    return %c0_i32, %c0_i32_0 : i32, i32
  }
  func.func @transform_2(%arg0: i32) -> (i32, i32) {
    %c0_i32 = arith.constant 0 : i32
    %c0_i32_0 = arith.constant 0 : i32
    %c0_i32_1 = arith.constant 0 : i32
    return %c0_i32, %c0_i32_0 : i32, i32
  }
  func.func @transform_3(%arg0: i32) -> (i32, i32) {
    %c0_i32 = arith.constant 0 : i32
    %c0_i32_0 = arith.constant 0 : i32
    return %arg0, %c0_i32 : i32, i32
  }
}

</mosaic_0001>

<llo_original>
// kernel: _linear_encoder.1
$region0: #{_linear_encoder.1}
  #allocation0 [shape = 'u32[]', space=smem, size = 0x4, offset = 0x4, fixed_abs, tag = 'smem constant byte address 0x4 - core index']
  #allocation1 [shape = 'u32[144,128]{1,0:T(1,128)}', space=vmem, size = 0x12000, scoped, tag = 'internal scratch']
  %s0 = inlined_call_operand.hbm [shape: f32[16,32], index: 0, kind: input, shape index: {}]
  %s1 = inlined_call_operand.hbm [shape: f32[32,32], index: 1, kind: input, shape index: {}]
  %s2 = inlined_call_operand.vmem [shape: f32[1,32], index: 2, kind: input, shape index: {}]
  %s3 = inlined_call_operand.hbm [shape: f32[16,32], index: 3, kind: output, shape index: {}]
  %s4 = sld [smem:[#allocation0]]
  $region30: #{_linear_encoder.1} parent=0
    _
  %s6 = ssub.s32 1, %s4
  %s7 = scalar_select 0, %s6, %s4
  $region1: #{_linear_encoder.1} parent=0
    #allocation2 [shape = 'u8[8192]{0}', space=vmem, size = 0x2000, scoped, tag = 'input window, operand 0, single buffered']
    #allocation3 [shape = 's32[1]{0}', space=sflag, size = 0x4, scoped, tag = 'scoped memory for _linear_encoder.1']
    #allocation4 [shape = 's32[1]{0}', space=sflag, size = 0x4, scoped, tag = 'scoped memory for _linear_encoder.1']
    #allocation5 [shape = 'u8[16384]{0}', space=vmem, size = 0x4000, scoped, tag = 'input window, operand 1, single buffered']
    #allocation6 [shape = 's32[1]{0}', space=sflag, size = 0x4, scoped, tag = 'scoped memory for _linear_encoder.1']
    #allocation7 [shape = 'u8[8192]{0}', space=vmem, size = 0x2000, scoped, tag = 'output window, operand 0, single buffered']
    %8 = vsyncpa [#allocation3], 0
    %9 = vsyncpa [#allocation6], 0
    %10 = vsyncpa [#allocation4], 0
    // Predicated region
    $region2: #{_linear_encoder.1} parent=1 // pred_check
      _
    $region3: #{_linear_encoder.1} parent=1 // pred_check_branch
      %12 = sbr.rel (0) target = $region5
    $region4: #{_linear_encoder.1} parent=1 // pred_region
      %s14 = ssub.s32 256, 256
      %15 = vsyncadd [#allocation3], %s14
      %s16 = sshll.u32 [#allocation2], 4
      %s17 = int_to_ptr.vmem [resolvable:$true] %s16
      %22 = dma.hbm_to_vmem [thread:$0]  %s0, 256, %s17, [#allocation3], 128, 128, 8
    $region5: #{_linear_encoder.1} parent=1 // pred_fallthru
      _
    // Predicated region
    $region6: #{_linear_encoder.1} parent=1 // pred_check
      _
    $region7: #{_linear_encoder.1} parent=1 // pred_check_branch
      %24 = sbr.rel (0) target = $region9
    $region8: #{_linear_encoder.1} parent=1 // pred_region
      %s26 = ssub.s32 512, 512
      %27 = vsyncadd [#allocation6], %s26
      %s28 = sshll.u32 [#allocation5], 4
      %s29 = int_to_ptr.vmem [resolvable:$true] %s28
      %34 = dma.hbm_to_vmem [thread:$0]  %s1, 512, %s29, [#allocation6], 128, 128, 8
    $region9: #{_linear_encoder.1} parent=1 // pred_fallthru
      _
    // Predicated region
    $region10: #{_linear_encoder.1} parent=1 // pred_check
      _
    $region11: #{_linear_encoder.1} parent=1 // pred_check_branch
      %36 = sbr.rel (0) target = $region13
    $region12: #{_linear_encoder.1} parent=1 // pred_region
      _
    $region13: #{_linear_encoder.1} parent=1 // pred_fallthru
      _
    // Predicated region
    $region14: #{_linear_encoder.1} parent=1 // pred_check
      _
    $region15: #{_linear_encoder.1} parent=1 // pred_check_branch
      %38 = sbr.rel (0) target = $region17
    $region16: #{_linear_encoder.1} parent=1 // pred_region
      %39 = dma.done [#allocation3], 256
    $region17: #{_linear_encoder.1} parent=1 // pred_fallthru
      _
    // Predicated region
    $region18: #{_linear_encoder.1} parent=1 // pred_check
      _
    $region19: #{_linear_encoder.1} parent=1 // pred_check_branch
      %41 = sbr.rel (0) target = $region21
    $region20: #{_linear_encoder.1} parent=1 // pred_region
      %42 = dma.done [#allocation6], 512
    $region21: #{_linear_encoder.1} parent=1 // pred_fallthru
      _
    %v43 = vld [vmem:[#allocation2] sm:$0xff]
    %v44 = vld [vmem:[#allocation2 + $0x8] sm:$0xff]
    %v45 = vld [vmem:[#allocation5] sm:$0xff]
    %v46 = vld [vmem:[#allocation5 + $0x8] sm:$0xff]
    %v47 = vld [vmem:[#allocation5 + $0x10] sm:$0xff]
    %v48 = vld [vmem:[#allocation5 + $0x18] sm:$0xff]
    %v49 = vld [vmem:[%s2] sm:$0x1]
    %v51 = vlaneseq
    %v52 = vshrl.u32 %v51, 7
    %v53 = vsub.s32 0, %v52
    %v54 = vrot.slane %v49, %v53
    %vm56 = vcmask 261120
    %v58 = vsel %vm56, %v43, 0
    %v61 = vsel %vm56, %v44, 0
    %63 = vmatprep.subr.mxu0 0.0
    %64 = vmatpush1.msra.mxu0 0.0
    %65 = vmatprep.subr.mxu0 0.0
    %66 = vmatpush1.msra.mxu0 0.0
    %67 = vmatprep.subr.mxu0 0.0
    %68 = vmatpush1.msra.mxu0 0.0
    %69 = vmatprep.subr.mxu0 0.0
    %70 = vmatpush1.msra.mxu0 0.0
    %71 = vmatprep.subr.mxu0 0.0
    %72 = vmatpush1.msra.mxu0 0.0
    %73 = vmatprep.subr.mxu0 0.0
    %74 = vmatpush1.msra.mxu0 0.0
    %75 = vmatprep.subr.mxu0 0.0
    %76 = vmatpush1.msra.mxu0 0.0
    %77 = vmatprep.subr.mxu0 0.0
    %78 = vmatpush1.msra.mxu0 0.0
    %79 = vmatprep.subr.mxu0 0.0
    %80 = vmatpush1.msra.mxu0 0.0
    %81 = vmatprep.subr.mxu0 0.0
    %82 = vmatpush1.msra.mxu0 0.0
    %83 = vmatprep.subr.mxu0 0.0
    %84 = vmatpush1.msra.mxu0 0.0
    %85 = vmatprep.subr.mxu0 0.0
    %86 = vmatpush1.msra.mxu0 0.0
    %87 = vmatprep.subr.mxu0 0.0
    %88 = vmatpush1.msra.mxu0 %v48
    %89 = vmatprep.subr.mxu0 0.0
    %90 = vmatpush1.msra.mxu0 %v47
    %91 = vmatprep.subr.mxu0 0.0
    %92 = vmatpush1.msra.mxu0 %v46
    %93 = vmatprep.subr.mxu0 0.0
    %94 = vmatpush1.msra.mxu0 %v45
    %95 = vmatprep.subr.mxu0 0.0
    %96 = vmatpush2.msra.mxu0 0.0
    %97 = vmatprep.subr.mxu0 0.0
    %98 = vmatpush2.msra.mxu0 0.0
    %99 = vmatprep.subr.mxu0 0.0
    %100 = vmatpush2.msra.mxu0 0.0
    %101 = vmatprep.subr.mxu0 0.0
    %102 = vmatpush2.msra.mxu0 0.0
    %103 = vmatprep.subr.mxu0 0.0
    %104 = vmatpush2.msra.mxu0 0.0
    %105 = vmatprep.subr.mxu0 0.0
    %106 = vmatpush2.msra.mxu0 0.0
    %107 = vmatprep.subr.mxu0 0.0
    %108 = vmatpush2.msra.mxu0 0.0
    %109 = vmatprep.subr.mxu0 0.0
    %110 = vmatpush2.msra.mxu0 0.0
    %111 = vmatprep.subr.mxu0 0.0
    %112 = vmatpush2.msra.mxu0 0.0
    %113 = vmatprep.subr.mxu0 0.0
    %114 = vmatpush2.msra.mxu0 0.0
    %115 = vmatprep.subr.mxu0 0.0
    %116 = vmatpush2.msra.mxu0 0.0
    %117 = vmatprep.subr.mxu0 0.0
    %118 = vmatpush2.msra.mxu0 0.0
    %119 = vmatprep.subr.mxu0 0.0
    %120 = vmatpush2.msra.mxu0 0.0
    %121 = vmatprep.subr.mxu0 0.0
    %122 = vmatpush2.msra.mxu0 0.0
    %123 = vmatprep.subr.mxu0 0.0
    %124 = vmatpush2.msra.mxu0 0.0
    %125 = vmatprep.subr.mxu0 0.0
    %126 = vmatpush2.msra.mxu0 0.0
    %127 = vmatprep.mubr.f32.mxu0 0.0
    %128 = vmatmul.mubr.f32.gmra.mxu0 %v58
    %v129 = vpop.f32.mrf.mxu0
    %v130 = vadd.f32 %v54, %v129
    %v131 = vpop.f32.mrf.mxu0
    %132 = vmatprep.mubr.f32.mxu0 0.0
    %133 = vmatmul.mubr.f32.gmra.mxu0 %v61
    %v134 = vpop.f32.mrf.mxu0
    %v135 = vadd.f32 %v54, %v134
    %v136 = vpop.f32.mrf.mxu0
    %137 = vdwg.mxu0
    %138 = vst.msk [vmem:[#allocation7] sm:$0xff] %vm56, %v130
    %139 = vst.msk [vmem:[#allocation7 + $0x8] sm:$0xff] %vm56, %v135
    // Predicated region
    $region22: #{_linear_encoder.1} parent=1 // pred_check
      _
    $region23: #{_linear_encoder.1} parent=1 // pred_check_branch
      %141 = sbr.rel (0) target = $region25
    $region24: #{_linear_encoder.1} parent=1 // pred_region
      %s143 = ssub.s32 256, 256
      %144 = vsyncadd [#allocation4], %s143
      %s145 = sshll.u32 [#allocation7], 4
      %s146 = int_to_ptr.vmem [resolvable:$true] %s145
      %151 = dma.vmem_to_hbm [thread:$0]  %s146, 256, %s3, [#allocation4], 128, 128, 8
    $region25: #{_linear_encoder.1} parent=1 // pred_fallthru
      _
    // Predicated region
    $region26: #{_linear_encoder.1} parent=1 // pred_check
      _
    $region27: #{_linear_encoder.1} parent=1 // pred_check_branch
      %153 = sbr.rel (0) target = $region29
    $region28: #{_linear_encoder.1} parent=1 // pred_region
      %154 = dma.done [#allocation4], 256
    $region29: #{_linear_encoder.1} parent=1 // pred_fallthru
      _
    %155 = vsyncpa [#allocation3], 1
    %156 = vsyncpa [#allocation6], 1
    %157 = vsyncpa [#allocation4], 1

</llo_original>
